<compile_context>
chip_gen: v7x
topology: tpu7x:2x2x1
jax: 0.10.0
libtpu: 0.0.40
codegen_flags: <defaults>
</compile_context>

<pallas_src>
import jax
import jax.numpy as jnp
from jax.experimental import pallas as pl
from jax.experimental.pallas import tpu as pltpu

_LANES = 384                    # lcm(3, 128): lane-dense and xyz-phase aligned
_ROW_BLOCK = 4096               # 4096 x 384 f32 = 6 MiB per tile
_VMEM_LIMIT = 48 * 1024 * 1024  # covers in+out double buffers (~24 MiB) + headroom


def _translate_kernel(x_ref, w_ref, o_ref):
    # x_ref / o_ref: (row_block, _LANES) lane-dense tile of points
    # w_ref:         (1, _LANES) pre-tiled weight row (resident across steps)
    o_ref[...] = x_ref[...] + w_ref[...]   # sublane-broadcast add (VPU, hidden under DMA)


def translate(x, weight):
    """x: (B, N, 3), weight: (3,) -> (B, N, 3) = x + weight."""
    B, N, C = x.shape
    assert C == 3
    dtype = x.dtype
    w = weight.astype(dtype)

    total = B * N * C
    rows = total // _LANES            # full 384-wide rows
    aligned = rows * _LANES
    tail = total - aligned            # always a multiple of 3 (384 % 3 == 0)

    if rows == 0:
        # Tiny input: not worth a kernel launch / wrapper plumbing.
        return x + w

    x_flat = x.reshape(-1)            # free bitcast (contiguous)
    if tail:
        x2d = x_flat[:aligned].reshape(rows, _LANES)   # prefix only (ragged case)
    else:
        x2d = x_flat.reshape(rows, _LANES)             # free bitcast (common case)

    # Pre-tiled weight row: flat index i gets weight[i % 3]; rows start at
    # multiples of 384 (a multiple of 3) so the period-3 pattern stays aligned.
    w_row = jnp.tile(w, _LANES // 3).reshape(1, _LANES)

    row_block = min(_ROW_BLOCK, rows)  # small inputs: block == full array dims (legal)

    out2d = pl.pallas_call(
        _translate_kernel,
        out_shape=jax.ShapeDtypeStruct((rows, _LANES), dtype),
        grid_spec=pltpu.PrefetchScalarGridSpec(
            num_scalar_prefetch=0,
            grid=(pl.cdiv(rows, row_block),),          # ragged last block is masked by Pallas
            in_specs=[
                pl.BlockSpec((row_block, _LANES), lambda r: (r, 0)),
                pl.BlockSpec((1, _LANES), lambda r: (0, 0)),   # weight: resident
            ],
            out_specs=pl.BlockSpec((row_block, _LANES), lambda r: (r, 0)),
        ),
        compiler_params=pltpu.CompilerParams(
            dimension_semantics=("parallel",),         # lets v7x shard across both TCs
            vmem_limit_bytes=_VMEM_LIMIT,
        ),
    )(x2d, w_row)

    out_flat = out2d.reshape(-1)                       # free bitcast
    if tail:
        # <384-element tail handled in plain jnp; xyz phase is aligned because
        # `aligned` is a multiple of 3.
        tail_out = x_flat[aligned:] + jnp.tile(w, tail // 3)
        out_flat = jnp.concatenate([out_flat, tail_out])
    return out_flat.reshape(B, N, C)
    # TODO(synk): for best end-to-end perf, fuse this add into the adjacent
    # producer/consumer kernel (standalone it is hard-capped at the HBM roofline).


if __name__ == "__main__":
    key = jax.random.PRNGKey(0)
    k1, k2, k3, k4, kw = jax.random.split(key, 5)
    C = 3

    # 1) Primary small case matching the module's init (weight = zeros):
    #    total = 2*256*3 = 1536 -> 4 aligned rows, single block, no tail.
    B, N = 2, 256
    x = jax.random.normal(k1, (B, N, C), dtype=jnp.float32)
    w0 = jnp.zeros((C,), dtype=jnp.float32)   # torch.nn.init.zeros_(weight)
    out = jax.block_until_ready(translate(x, w0))
    assert out.shape == (B, N, C)
    assert jnp.allclose(out, x + w0, atol=1e-6), "mismatch (zero weight)"

    w = jax.random.normal(kw, (C,), dtype=jnp.float32)

    # 2) Multi-block grid with a ragged last block (4375 rows, block 4096), no pad/slice.
    B2, N2 = 8, 70000
    x2 = jax.random.normal(k2, (B2, N2, C), dtype=jnp.float32)
    out2 = jax.block_until_ready(translate(x2, w))
    assert out2.shape == (B2, N2, C)
    assert jnp.allclose(out2, x2 + w, atol=1e-6), "mismatch (multi-block)"

    # 3) Ragged-tail path: 600 elements -> 1 aligned row + 216-element jnp tail.
    B3, N3 = 2, 100
    x3 = jax.random.normal(k3, (B3, N3, C), dtype=jnp.float32)
    out3 = jax.block_until_ready(translate(x3, w))
    assert out3.shape == (B3, N3, C)
    assert jnp.allclose(out3, x3 + w, atol=1e-6), "mismatch (ragged tail)"

    # 4) Tiny-input fallback (total < 384): plain jnp path.
    B4, N4 = 2, 16
    x4 = jax.random.normal(k4, (B4, N4, C), dtype=jnp.float32)
    out4 = jax.block_until_ready(translate(x4, w))
    assert out4.shape == (B4, N4, C)
    assert jnp.allclose(out4, x4 + w, atol=1e-6), "mismatch (tiny fallback)"

    print("KERNEL_OK")
</pallas_src>

<mosaic_0001>
module attributes {stable_mosaic.version = 11 : i64} {
  func.func @_translate_kernel(%arg0: i32, %arg1: memref<4x384xf32, #tpu.memory_space<vmem>>, %arg2: memref<1x384xf32, #tpu.memory_space<vmem>>, %arg3: memref<4x384xf32, #tpu.memory_space<vmem>>) attributes {dimension_semantics = [#tpu.dimension_semantics<parallel>], iteration_bounds = array<i64: 1>, scalar_prefetch = 0 : i64, scratch_operands = 0 : i64, tpu.core_type = #tpu.core_type<tc>, window_params = [{transform_indices = @transform_0, window_bounds = array<i64: 4, 384>}, {pipeline_mode = #tpu.pipeline_mode<synchronous>, transform_indices = @transform_1, window_bounds = array<i64: 1, 384>}, {transform_indices = @transform_2, window_bounds = array<i64: 4, 384>}]} {
    %c0 = arith.constant 0 : index
    %c0_0 = arith.constant 0 : index
    %0 = vector.load %arg1[%c0, %c0_0] : memref<4x384xf32, #tpu.memory_space<vmem>>, vector<4x384xf32>
    %c0_1 = arith.constant 0 : index
    %c0_2 = arith.constant 0 : index
    %1 = vector.load %arg2[%c0_1, %c0_2] : memref<1x384xf32, #tpu.memory_space<vmem>>, vector<1x384xf32>
    %2 = vector.broadcast %1 : vector<1x384xf32> to vector<4x384xf32>
    %3 = arith.addf %0, %2 : vector<4x384xf32>
    %c0_3 = arith.constant 0 : index
    %c0_4 = arith.constant 0 : index
    %4 = vector.load %arg3[%c0_3, %c0_4] : memref<4x384xf32, #tpu.memory_space<vmem>>, vector<4x384xf32>
    tpu.vector_store %arg3[%c0_3, %c0_4], %3 {strides = array<i32>} : memref<4x384xf32, #tpu.memory_space<vmem>>, vector<4x384xf32>,
    return
  }
  func.func @transform_0(%arg0: i32) -> (i32, i32) {
    %c0_i32 = arith.constant 0 : i32
    %c0_i32_0 = arith.constant 0 : i32
    return %arg0, %c0_i32 : i32, i32
  }
  func.func @transform_1(%arg0: i32) -> (i32, i32) {
    %c0_i32 = arith.constant 0 : i32
    %c0_i32_0 = arith.constant 0 : i32
    %c0_i32_1 = arith.constant 0 : i32
    return %c0_i32, %c0_i32_0 : i32, i32
  }
  func.func @transform_2(%arg0: i32) -> (i32, i32) {
    %c0_i32 = arith.constant 0 : i32
    %c0_i32_0 = arith.constant 0 : i32
    return %arg0, %c0_i32 : i32, i32
  }
}

</mosaic_0001>

<llo_original>
// kernel: tpu_custom_call.1
$region0: #{tpu_custom_call.1}
  #allocation0 [shape = 'u32[]', space=smem, size = 0x4, offset = 0x4, fixed_abs, tag = 'smem constant byte address 0x4 - core index']
  #allocation1 [shape = 'u32[144,128]{1,0:T(1,128)}', space=vmem, size = 0x12000, scoped, tag = 'internal scratch']
  %s0 = inlined_call_operand.hbm [shape: f32[4,384], index: 0, kind: input, shape index: {}]
  %s1 = inlined_call_operand.vmem [shape: f32[1,384], index: 1, kind: input, shape index: {}]
  %s2 = inlined_call_operand.hbm [shape: f32[4,384], index: 2, kind: output, shape index: {}]
  %s3 = sld [smem:[#allocation0]]
  $region22: #{tpu_custom_call.1} parent=0
    _
  %s5 = ssub.s32 1, %s3
  %s6 = scalar_select 0, %s5, %s3
  $region1: #{tpu_custom_call.1} parent=0
    #allocation2 [shape = 'u8[6144]{0}', space=vmem, size = 0x1800, scoped, tag = 'input window, operand 0, single buffered']
    #allocation3 [shape = 's32[1]{0}', space=sflag, size = 0x4, scoped, tag = 'scoped memory for tpu_custom_call.1']
    #allocation4 [shape = 's32[1]{0}', space=sflag, size = 0x4, scoped, tag = 'scoped memory for tpu_custom_call.1']
    #allocation5 [shape = 'u8[6144]{0}', space=vmem, size = 0x1800, scoped, tag = 'output window, operand 0, single buffered']
    %7 = vsyncpa [#allocation3], 0
    %8 = vsyncpa [#allocation4], 0
    // Predicated region
    $region2: #{tpu_custom_call.1} parent=1 // pred_check
      _
    $region3: #{tpu_custom_call.1} parent=1 // pred_check_branch
      %10 = sbr.rel (0) target = $region5
    $region4: #{tpu_custom_call.1} parent=1 // pred_region
      %s12 = ssub.s32 192, 192
      %13 = vsyncadd [#allocation3], %s12
      %s15 = sshll.u32 [#allocation2], 4
      %s16 = int_to_ptr.vmem [resolvable:$true] %s15
      %18 = dma.hbm_to_vmem [thread:$0]  %s0, 192, %s16, [#allocation3]
    $region5: #{tpu_custom_call.1} parent=1 // pred_fallthru
      _
    // Predicated region
    $region6: #{tpu_custom_call.1} parent=1 // pred_check
      _
    $region7: #{tpu_custom_call.1} parent=1 // pred_check_branch
      %20 = sbr.rel (0) target = $region9
    $region8: #{tpu_custom_call.1} parent=1 // pred_region
      _
    $region9: #{tpu_custom_call.1} parent=1 // pred_fallthru
      _
    // Predicated region
    $region10: #{tpu_custom_call.1} parent=1 // pred_check
      _
    $region11: #{tpu_custom_call.1} parent=1 // pred_check_branch
      %22 = sbr.rel (0) target = $region13
    $region12: #{tpu_custom_call.1} parent=1 // pred_region
      %23 = dma.done [#allocation3], 192
    $region13: #{tpu_custom_call.1} parent=1 // pred_fallthru
      _
    %v24 = vld [vmem:[#allocation2] sm:$0xff]
    %v25 = vld [vmem:[#allocation2 + $0x8] sm:$0xf]
    %v26 = vld [vmem:[%s1] sm:$0x7]
    %v28 = vlaneseq
    %v29 = vshrl.u32 %v28, 7
    %v30 = vsub.s32 0, %v29
    %v31 = vrot.slane %v26, %v30
    %v32 = vlaneseq
    %v33 = vshrl.u32 %v32, 7
    %v34 = vsub.s32 1, %v33
    %v35 = vrot.slane %v26, %v34
    %v36 = vlaneseq
    %v37 = vshrl.u32 %v36, 7
    %v38 = vsub.s32 2, %v37
    %v39 = vrot.slane %v26, %v38
    %v41 = vcombine.low %v31, %v35
    %v43 = vadd.f32 %v24, %v41
    %v44 = vadd.f32 %v25, %v39
    %45 = vst [vmem:[#allocation5] sm:$0xff] %v43
    %46 = vst [vmem:[#allocation5 + $0x8] sm:$0xf] %v44
    // Predicated region
    $region14: #{tpu_custom_call.1} parent=1 // pred_check
      _
    $region15: #{tpu_custom_call.1} parent=1 // pred_check_branch
      %48 = sbr.rel (0) target = $region17
    $region16: #{tpu_custom_call.1} parent=1 // pred_region
      %s50 = ssub.s32 192, 192
      %51 = vsyncadd [#allocation4], %s50
      %s53 = sshll.u32 [#allocation5], 4
      %s54 = int_to_ptr.vmem [resolvable:$true] %s53
      %56 = dma.vmem_to_hbm [thread:$0]  %s54, 192, %s2, [#allocation4]
    $region17: #{tpu_custom_call.1} parent=1 // pred_fallthru
      _
    // Predicated region
    $region18: #{tpu_custom_call.1} parent=1 // pred_check
      _
    $region19: #{tpu_custom_call.1} parent=1 // pred_check_branch
      %58 = sbr.rel (0) target = $region21
    $region20: #{tpu_custom_call.1} parent=1 // pred_region
      %59 = dma.done [#allocation4], 192
    $region21: #{tpu_custom_call.1} parent=1 // pred_fallthru
      _
    %60 = vsyncpa [#allocation3], 1
    %61 = vsyncpa [#allocation4], 1

</llo_original>
